<compile_context>
chip_gen: v7x
topology: tpu7x:2x2x1
jax: 0.10.0
libtpu: 0.0.40
codegen_flags: <defaults>
</compile_context>

<pallas_src>
import jax
import jax.numpy as jnp
from jax.experimental import pallas as pl
from jax.experimental.pallas import tpu as pltpu

HIDDEN = 256
_LANE = 128


def _round_up(x, m):
    return (x + m - 1) // m * m


def qnet_kernel(sat_ref, wf_ref, b12_ref, w2h_ref, w3_ref, b3_ref, o_ref):
    # Fused fc1 + (a @ W2_a): one (2H, S+A) x (S+A, bt) bf16 MXU matmul.
    # Top half = fc1 pre-activation, bottom half = action contribution to
    # fc2.  Stacked [b1; b2] bias column added in f32.
    pre = jnp.dot(wf_ref[...], sat_ref[...],
                  preferred_element_type=jnp.float32) + b12_ref[...]

    # fc1 ReLU (f32), feature-major: (H, bt).
    h1 = jnp.maximum(pre[:HIDDEN], 0.0)

    # fc2: W2_h.T @ h1 + (a-part + b2), then ReLU.  No transpose needed.
    h2 = jnp.dot(w2h_ref[...], h1.astype(jnp.bfloat16),
                 preferred_element_type=jnp.float32) + pre[HIDDEN:]
    h2 = jnp.maximum(h2, 0.0)

    # fc3 as (1, H) @ (H, bt): lane-dense (1, bt) row -> unmasked full-width
    # stores; bf16 operands, f32 accumulation.
    q = jnp.dot(w3_ref[...], h2.astype(jnp.bfloat16),
                preferred_element_type=jnp.float32)
    o_ref[...] = q + b3_ref[0, 0]


def qnet_forward(s, a, params, *, batch_tile=2048):
    B, state_size = s.shape
    _, action_size = a.shape
    SA = state_size + action_size
    w1, b1, w2h, w2a, b2, w3, b3 = params

    # --- batch tiling -----------------------------------------------------
    # Lane axis is the batch, so tiles are multiples of 128.  Keep the tile
    # capped at the padded batch, but force >= 2 grid steps whenever the
    # batch spans >= 2 lane tiles so both v7x TensorCores get work.
    b128 = _round_up(B, _LANE)
    bt = min(_round_up(batch_tile, _LANE), b128)
    if bt == b128 and b128 >= 2 * _LANE:
        bt = _round_up(b128 // 2, _LANE)
    B_pad = _round_up(b128, bt)
    grid = (B_pad // bt,)

    bf = jnp.bfloat16

    # Feature-major streamed input: [s; a].T as (S+A, B_pad) bf16.
    sa = jnp.concatenate([s, a], axis=-1).astype(bf).T
    if B_pad != B:
        sa = jnp.pad(sa, ((0, 0), (0, B_pad - B)))  # padded cols discarded

    # Fused block-diagonal weight [[w1.T, 0], [0, w2a.T]]  -> (2H, S+A) bf16.
    wf = jnp.zeros((2 * HIDDEN, SA), jnp.float32)
    wf = wf.at[:HIDDEN, :state_size].set(w1.T)
    wf = wf.at[HIDDEN:, state_size:].set(w2a.T)
    wf = wf.astype(bf)

    # Stacked bias column [b1; b2] (f32), transposed fc2 weight, fc3 row.
    b12 = jnp.concatenate([b1.reshape(HIDDEN, 1), b2.reshape(HIDDEN, 1)],
                          axis=0).astype(jnp.float32)
    w2ht = w2h.T.astype(bf)
    w3_row = w3.reshape(1, HIDDEN).astype(bf)
    b3_s = b3.reshape(1, 1).astype(jnp.float32)

    # Advisory cost hint so XLA overlaps the surrounding casts/pad/reshape.
    flops = 2 * B_pad * (SA * 2 * HIDDEN + HIDDEN * HIDDEN + HIDDEN)
    bytes_accessed = (sa.size * 2 + B_pad * 4
                      + grid[0] * (wf.size * 2 + b12.size * 4
                                   + w2ht.size * 2 + w3_row.size * 2 + 4))
    cost = pl.CostEstimate(flops=int(flops), transcendentals=0,
                           bytes_accessed=int(bytes_accessed))

    def rep(shape):  # weight/bias blocks: same block every grid step
        return pl.BlockSpec(shape, lambda i: (0, 0))

    out = pl.pallas_call(
        qnet_kernel,
        out_shape=jax.ShapeDtypeStruct((1, B_pad), jnp.float32),
        grid=grid,
        in_specs=[
            pl.BlockSpec((SA, bt), lambda i: (0, i)),           # [s; a].T bf16
            rep((2 * HIDDEN, SA)),                              # fused weight bf16
            rep((2 * HIDDEN, 1)),                               # [b1; b2] f32
            rep((HIDDEN, HIDDEN)),                              # w2_h.T bf16
            rep((1, HIDDEN)),                                   # w3 row bf16
            pl.BlockSpec(memory_space=pltpu.MemorySpace.SMEM),  # b3 scalar
        ],
        out_specs=pl.BlockSpec((1, bt), lambda i: (0, i)),
        compiler_params=pltpu.CompilerParams(
            dimension_semantics=("parallel",),
            vmem_limit_bytes=32 * 1024 * 1024),
        cost_estimate=cost,
    )(sa, wf, b12, w2ht, w3_row, b3_s)

    # (1, B_pad) lane-dense row -> (B, 1) column, dropping padded rows.
    return out.reshape(B_pad, 1)[:B]


def init_params(key, state_size, action_size):
    """Deterministic synthetic parameters (same shapes as the torch module)."""
    ks = jax.random.split(key, 6)
    w1 = jax.random.normal(ks[0], (state_size, HIDDEN), jnp.float32) * 0.05
    b1 = jax.random.normal(ks[1], (1, HIDDEN), jnp.float32) * 0.05
    w2 = jax.random.normal(ks[2], (HIDDEN + action_size, HIDDEN), jnp.float32) * 0.05
    b2 = jax.random.normal(ks[3], (1, HIDDEN), jnp.float32) * 0.05
    w2h, w2a = w2[:HIDDEN], w2[HIDDEN:]
    w3 = jax.random.normal(ks[4], (HIDDEN, 1), jnp.float32) * 0.05
    b3 = jax.random.normal(ks[5], (1, 1), jnp.float32) * 0.05
    return (w1, b1, w2h, w2a, b2, w3, b3)


def qnet_reference(s, a, params, *, mirror_bf16=True):
    """Pure-JAX reference; mirrors the kernel's bf16 operand rounding so the
    comparison isolates kernel correctness (accumulation stays f32).
    Note: bf16 streaming is an intentional precision tradeoff vs the strict
    f32 PyTorch forward."""
    w1, b1, w2h, w2a, b2, w3, b3 = params
    if mirror_bf16:
        c = lambda t: t.astype(jnp.bfloat16).astype(jnp.float32)
        s, a, w1, w2h, w2a, w3 = c(s), c(a), c(w1), c(w2h), c(w2a), c(w3)
    x = jnp.maximum(s @ w1 + b1, 0.0)
    if mirror_bf16:
        x = x.astype(jnp.bfloat16).astype(jnp.float32)
    x = jnp.maximum(x @ w2h + a @ w2a + b2, 0.0)
    if mirror_bf16:
        x = x.astype(jnp.bfloat16).astype(jnp.float32)
    return x @ w3 + b3


if __name__ == "__main__":
    state_size, action_size = 16, 8

    key = jax.random.PRNGKey(0)
    k_p = jax.random.fold_in(key, 7)
    params = init_params(k_p, state_size, action_size)

    # Small demo batch (single 128-row tile) and a larger, non-multiple batch
    # that exercises padding + the multi-step pipelined / megacore grid.
    for batch in (8, 1000):
        ks, ka = jax.random.split(jax.random.fold_in(key, batch))
        s = jax.random.normal(ks, (batch, state_size), jnp.float32)
        a = jax.random.normal(ka, (batch, action_size), jnp.float32)

        out = jax.block_until_ready(qnet_forward(s, a, params))
        ref = qnet_reference(s, a, params)

        assert out.shape == (batch, 1), out.shape
        assert jnp.allclose(out, ref, atol=2e-3, rtol=2e-3), (
            float(jnp.max(jnp.abs(out - ref))))

    print("KERNEL_OK")
</pallas_src>

<mosaic_0001>
module attributes {stable_mosaic.version = 11 : i64} {
  func.func @qnet_kernel(%arg0: i32, %arg1: memref<24x128xbf16, #tpu.memory_space<vmem>>, %arg2: memref<512x24xbf16, #tpu.memory_space<vmem>>, %arg3: memref<512x1xf32, #tpu.memory_space<vmem>>, %arg4: memref<256x256xbf16, #tpu.memory_space<vmem>>, %arg5: memref<1x256xbf16, #tpu.memory_space<vmem>>, %arg6: memref<1x1xf32, #tpu.memory_space<smem>>, %arg7: memref<1x128xf32, #tpu.memory_space<vmem>>) attributes {dimension_semantics = [#tpu.dimension_semantics<parallel>], iteration_bounds = array<i64: 1>, scalar_prefetch = 0 : i64, scratch_operands = 0 : i64, tpu.core_type = #tpu.core_type<tc>, window_params = [{transform_indices = @transform_0, window_bounds = array<i64: 24, 128>}, {pipeline_mode = #tpu.pipeline_mode<synchronous>, transform_indices = @transform_1, window_bounds = array<i64: 512, 24>}, {pipeline_mode = #tpu.pipeline_mode<synchronous>, transform_indices = @transform_2, window_bounds = array<i64: 512, 1>}, {pipeline_mode = #tpu.pipeline_mode<synchronous>, transform_indices = @transform_3, window_bounds = array<i64: 256, 256>}, {pipeline_mode = #tpu.pipeline_mode<synchronous>, transform_indices = @transform_4, window_bounds = array<i64: 1, 256>}, {transform_indices = @transform_5, window_bounds = array<i64: 1, 1>}, {transform_indices = @transform_6, window_bounds = array<i64: 1, 128>}]} {
    %c0 = arith.constant 0 : index
    %c0_0 = arith.constant 0 : index
    %0 = vector.load %arg2[%c0, %c0_0] : memref<512x24xbf16, #tpu.memory_space<vmem>>, vector<512x24xbf16>
    %c0_1 = arith.constant 0 : index
    %c0_2 = arith.constant 0 : index
    %1 = vector.load %arg1[%c0_1, %c0_2] : memref<24x128xbf16, #tpu.memory_space<vmem>>, vector<24x128xbf16>
    %cst = arith.constant dense<0.000000e+00> : vector<512x128xf32>
    %2 = tpu.matmul %0, %1, %cst {dimension_numbers = #tpu.dot_dimension_numbers<[1], [0], [0], [1], [0, 0, 1, 1], [], []>} : vector<512x24xbf16>, vector<24x128xbf16>, vector<512x128xf32> -> vector<512x128xf32>
    %c0_3 = arith.constant 0 : index
    %c0_4 = arith.constant 0 : index
    %3 = vector.load %arg3[%c0_3, %c0_4] : memref<512x1xf32, #tpu.memory_space<vmem>>, vector<512x1xf32>
    %4 = vector.broadcast %3 : vector<512x1xf32> to vector<512x128xf32>
    %5 = arith.addf %2, %4 : vector<512x128xf32>
    %6 = vector.extract_strided_slice %5 {offsets = [0, 0], sizes = [256, 128], strides = [1, 1]} : vector<512x128xf32> to vector<256x128xf32>
    %cst_5 = arith.constant 0.000000e+00 : f32
    %7 = vector.broadcast %cst_5 : f32 to vector<256x128xf32>
    %8 = arith.maximumf %6, %7 : vector<256x128xf32>
    %c0_6 = arith.constant 0 : index
    %c0_7 = arith.constant 0 : index
    %9 = vector.load %arg4[%c0_6, %c0_7] : memref<256x256xbf16, #tpu.memory_space<vmem>>, vector<256x256xbf16>
    %10 = arith.truncf %8 : vector<256x128xf32> to vector<256x128xbf16>
    %cst_8 = arith.constant dense<0.000000e+00> : vector<256x128xf32>
    %11 = tpu.matmul %9, %10, %cst_8 {dimension_numbers = #tpu.dot_dimension_numbers<[1], [0], [0], [1], [0, 0, 1, 1], [], []>} : vector<256x256xbf16>, vector<256x128xbf16>, vector<256x128xf32> -> vector<256x128xf32>
    %12 = vector.extract_strided_slice %5 {offsets = [256, 0], sizes = [256, 128], strides = [1, 1]} : vector<512x128xf32> to vector<256x128xf32>
    %13 = arith.addf %11, %12 : vector<256x128xf32>
    %cst_9 = arith.constant 0.000000e+00 : f32
    %14 = vector.broadcast %cst_9 : f32 to vector<256x128xf32>
    %15 = arith.maximumf %13, %14 : vector<256x128xf32>
    %c0_10 = arith.constant 0 : index
    %c0_11 = arith.constant 0 : index
    %16 = vector.load %arg5[%c0_10, %c0_11] : memref<1x256xbf16, #tpu.memory_space<vmem>>, vector<1x256xbf16>
    %17 = arith.truncf %15 : vector<256x128xf32> to vector<256x128xbf16>
    %cst_12 = arith.constant dense<0.000000e+00> : vector<1x128xf32>
    %18 = tpu.matmul %16, %17, %cst_12 {dimension_numbers = #tpu.dot_dimension_numbers<[1], [0], [0], [1], [0, 0, 1, 1], [], []>} : vector<1x256xbf16>, vector<256x128xbf16>, vector<1x128xf32> -> vector<1x128xf32>
    %c0_13 = arith.constant 0 : index
    %c0_14 = arith.constant 0 : index
    %19 = memref.load %arg6[%c0_13, %c0_14] : memref<1x1xf32, #tpu.memory_space<smem>>
    %20 = vector.broadcast %19 : f32 to vector<1x128xf32>
    %21 = arith.addf %18, %20 : vector<1x128xf32>
    %c0_15 = arith.constant 0 : index
    %c0_16 = arith.constant 0 : index
    %22 = vector.load %arg7[%c0_15, %c0_16] : memref<1x128xf32, #tpu.memory_space<vmem>>, vector<1x128xf32>
    tpu.vector_store %arg7[%c0_15, %c0_16], %21 {strides = array<i32>} : memref<1x128xf32, #tpu.memory_space<vmem>>, vector<1x128xf32>,
    return
  }
  func.func @transform_0(%arg0: i32) -> (i32, i32) {
    %c0_i32 = arith.constant 0 : i32
    %c0_i32_0 = arith.constant 0 : i32
    return %c0_i32, %arg0 : i32, i32
  }
  func.func @transform_1(%arg0: i32) -> (i32, i32) {
    %c0_i32 = arith.constant 0 : i32
    %c0_i32_0 = arith.constant 0 : i32
    %c0_i32_1 = arith.constant 0 : i32
    return %c0_i32, %c0_i32_0 : i32, i32
  }
  func.func @transform_2(%arg0: i32) -> (i32, i32) {
    %c0_i32 = arith.constant 0 : i32
    %c0_i32_0 = arith.constant 0 : i32
    %c0_i32_1 = arith.constant 0 : i32
    return %c0_i32, %c0_i32_0 : i32, i32
  }
  func.func @transform_3(%arg0: i32) -> (i32, i32) {
    %c0_i32 = arith.constant 0 : i32
    %c0_i32_0 = arith.constant 0 : i32
    %c0_i32_1 = arith.constant 0 : i32
    return %c0_i32, %c0_i32_0 : i32, i32
  }
  func.func @transform_4(%arg0: i32) -> (i32, i32) {
    %c0_i32 = arith.constant 0 : i32
    %c0_i32_0 = arith.constant 0 : i32
    %c0_i32_1 = arith.constant 0 : i32
    return %c0_i32, %c0_i32_0 : i32, i32
  }
  func.func @transform_5(%arg0: i32) -> (i32, i32) {
    %c0_i32 = arith.constant 0 : i32
    %c0_i32_0 = arith.constant 0 : i32
    %c0_i32_1 = arith.constant 0 : i32
    return %c0_i32, %c0_i32_0 : i32, i32
  }
  func.func @transform_6(%arg0: i32) -> (i32, i32) {
    %c0_i32 = arith.constant 0 : i32
    %c0_i32_0 = arith.constant 0 : i32
    return %c0_i32, %arg0 : i32, i32
  }
}

</mosaic_0001>

<llo_original>
// kernel: tpu_custom_call.1
$region0: #{tpu_custom_call.1}
  #allocation0 [shape = 'u32[]', space=smem, size = 0x4, offset = 0x4, fixed_abs, tag = 'smem constant byte address 0x4 - core index']
  #allocation1 [shape = 'u32[144,128]{1,0:T(1,128)}', space=vmem, size = 0x12000, scoped, tag = 'internal scratch']
  #allocation2 [shape = 'f32[1,1]{1,0:T(1,128)S(6)}', space=smem, size = 0x200, scoped, tag = 'scoped memory for tpu_custom_call.1']
  %s0 = inlined_call_operand.vmem [shape: bf16[24,128], index: 0, kind: input, shape index: {}]
  %s1 = inlined_call_operand.vmem [shape: bf16[512,24], index: 1, kind: input, shape index: {}]
  %s2 = inlined_call_operand.vmem [shape: f32[512,1], index: 2, kind: input, shape index: {}]
  %s3 = inlined_call_operand.vmem [shape: bf16[256,256], index: 3, kind: input, shape index: {}]
  %s4 = inlined_call_operand.vmem [shape: bf16[1,256], index: 4, kind: input, shape index: {}]
  %s5 = inlined_call_operand.<no memory space> [shape: f32[1,1], index: 5, kind: input, shape index: {}]
  %s6 = inlined_call_operand.hbm [shape: f32[1,128], index: 6, kind: output, shape index: {}]
  %s7 = sld [smem:[#allocation0]]
  $region34: #{tpu_custom_call.1} parent=0
    _
  %s9 = ssub.s32 1, %s7
  %s10 = scalar_select 0, %s9, %s7
  %11 = sst [smem:[#allocation2]] %s5
  $region1: #{tpu_custom_call.1} parent=0
    #allocation3 [shape = 'u8[512]{0}', space=vmem, size = 0x400, scoped, tag = 'output window, operand 0, single buffered']
    #allocation4 [shape = 's32[1]{0}', space=sflag, size = 0x4, scoped, tag = 'scoped memory for tpu_custom_call.1']
    %12 = vsyncpa [#allocation4], 0
    // Predicated region
    $region2: #{tpu_custom_call.1} parent=1 // pred_check
      _
    $region3: #{tpu_custom_call.1} parent=1 // pred_check_branch
      %14 = sbr.rel (0) target = $region5
    $region4: #{tpu_custom_call.1} parent=1 // pred_region
      _
    $region5: #{tpu_custom_call.1} parent=1 // pred_fallthru
      _
    // Predicated region
    $region6: #{tpu_custom_call.1} parent=1 // pred_check
      _
    $region7: #{tpu_custom_call.1} parent=1 // pred_check_branch
      %16 = sbr.rel (0) target = $region9
    $region8: #{tpu_custom_call.1} parent=1 // pred_region
      _
    $region9: #{tpu_custom_call.1} parent=1 // pred_fallthru
      _
    // Predicated region
    $region10: #{tpu_custom_call.1} parent=1 // pred_check
      _
    $region11: #{tpu_custom_call.1} parent=1 // pred_check_branch
      %18 = sbr.rel (0) target = $region13
    $region12: #{tpu_custom_call.1} parent=1 // pred_region
      _
    $region13: #{tpu_custom_call.1} parent=1 // pred_fallthru
      _
    // Predicated region
    $region14: #{tpu_custom_call.1} parent=1 // pred_check
      _
    $region15: #{tpu_custom_call.1} parent=1 // pred_check_branch
      %20 = sbr.rel (0) target = $region17
    $region16: #{tpu_custom_call.1} parent=1 // pred_region
      _
    $region17: #{tpu_custom_call.1} parent=1 // pred_fallthru
      _
    // Predicated region
    $region18: #{tpu_custom_call.1} parent=1 // pred_check
      _
    $region19: #{tpu_custom_call.1} parent=1 // pred_check_branch
      %22 = sbr.rel (0) target = $region21
    $region20: #{tpu_custom_call.1} parent=1 // pred_region
      _
    $region21: #{tpu_custom_call.1} parent=1 // pred_fallthru
      _
    // Predicated region
    $region22: #{tpu_custom_call.1} parent=1 // pred_check
      _
    $region23: #{tpu_custom_call.1} parent=1 // pred_check_branch
      %24 = sbr.rel (0) target = $region25
    $region24: #{tpu_custom_call.1} parent=1 // pred_region
      _
    $region25: #{tpu_custom_call.1} parent=1 // pred_fallthru
      _
    %v26 = vld [vmem:[%s1] sm:$0xf]
    %v27 = vld [vmem:[%s1 + $0x4] sm:$0xf]
    %v28 = vld [vmem:[%s1 + $0x8] sm:$0xf]
    %v29 = vld [vmem:[%s1 + $0xc] sm:$0xf]
    %v30 = vld [vmem:[%s1 + $0x10] sm:$0xf]
    %v31 = vld [vmem:[%s1 + $0x14] sm:$0xf]
    %v32 = vld [vmem:[%s1 + $0x18] sm:$0xf]
    %v33 = vld [vmem:[%s1 + $0x1c] sm:$0xf]
    %v34 = vld [vmem:[%s1 + $0x20] sm:$0xf]
    %v35 = vld [vmem:[%s1 + $0x24] sm:$0xf]
    %v36 = vld [vmem:[%s1 + $0x28] sm:$0xf]
    %v37 = vld [vmem:[%s1 + $0x2c] sm:$0xf]
    %v38 = vld [vmem:[%s1 + $0x30] sm:$0xf]
    %v39 = vld [vmem:[%s1 + $0x34] sm:$0xf]
    %v40 = vld [vmem:[%s1 + $0x38] sm:$0xf]
    %v41 = vld [vmem:[%s1 + $0x3c] sm:$0xf]
    %v42 = vld [vmem:[%s1 + $0x40] sm:$0xf]
    %v43 = vld [vmem:[%s1 + $0x44] sm:$0xf]
    %v44 = vld [vmem:[%s1 + $0x48] sm:$0xf]
    %v45 = vld [vmem:[%s1 + $0x4c] sm:$0xf]
    %v46 = vld [vmem:[%s1 + $0x50] sm:$0xf]
    %v47 = vld [vmem:[%s1 + $0x54] sm:$0xf]
    %v48 = vld [vmem:[%s1 + $0x58] sm:$0xf]
    %v49 = vld [vmem:[%s1 + $0x5c] sm:$0xf]
    %v50 = vld [vmem:[%s1 + $0x60] sm:$0xf]
    %v51 = vld [vmem:[%s1 + $0x64] sm:$0xf]
    %v52 = vld [vmem:[%s1 + $0x68] sm:$0xf]
    %v53 = vld [vmem:[%s1 + $0x6c] sm:$0xf]
    %v54 = vld [vmem:[%s1 + $0x70] sm:$0xf]
    %v55 = vld [vmem:[%s1 + $0x74] sm:$0xf]
    %v56 = vld [vmem:[%s1 + $0x78] sm:$0xf]
    %v57 = vld [vmem:[%s1 + $0x7c] sm:$0xf]
    %v58 = vld [vmem:[%s1 + $0x80] sm:$0xf]
    %v59 = vld [vmem:[%s1 + $0x84] sm:$0xf]
    %v60 = vld [vmem:[%s1 + $0x88] sm:$0xf]
    %v61 = vld [vmem:[%s1 + $0x8c] sm:$0xf]
    %v62 = vld [vmem:[%s1 + $0x90] sm:$0xf]
    %v63 = vld [vmem:[%s1 + $0x94] sm:$0xf]
    %v64 = vld [vmem:[%s1 + $0x98] sm:$0xf]
    %v65 = vld [vmem:[%s1 + $0x9c] sm:$0xf]
    %v66 = vld [vmem:[%s1 + $0xa0] sm:$0xf]
    %v67 = vld [vmem:[%s1 + $0xa4] sm:$0xf]
    %v68 = vld [vmem:[%s1 + $0xa8] sm:$0xf]
    %v69 = vld [vmem:[%s1 + $0xac] sm:$0xf]
    %v70 = vld [vmem:[%s1 + $0xb0] sm:$0xf]
    %v71 = vld [vmem:[%s1 + $0xb4] sm:$0xf]
    %v72 = vld [vmem:[%s1 + $0xb8] sm:$0xf]
    %v73 = vld [vmem:[%s1 + $0xbc] sm:$0xf]
    %v74 = vld [vmem:[%s1 + $0xc0] sm:$0xf]
    %v75 = vld [vmem:[%s1 + $0xc4] sm:$0xf]
    %v76 = vld [vmem:[%s1 + $0xc8] sm:$0xf]
    %v77 = vld [vmem:[%s1 + $0xcc] sm:$0xf]
    %v78 = vld [vmem:[%s1 + $0xd0] sm:$0xf]
    %v79 = vld [vmem:[%s1 + $0xd4] sm:$0xf]
    %v80 = vld [vmem:[%s1 + $0xd8] sm:$0xf]
    %v81 = vld [vmem:[%s1 + $0xdc] sm:$0xf]
    %v82 = vld [vmem:[%s1 + $0xe0] sm:$0xf]
    %v83 = vld [vmem:[%s1 + $0xe4] sm:$0xf]
    %v84 = vld [vmem:[%s1 + $0xe8] sm:$0xf]
    %v85 = vld [vmem:[%s1 + $0xec] sm:$0xf]
    %v86 = vld [vmem:[%s1 + $0xf0] sm:$0xf]
    %v87 = vld [vmem:[%s1 + $0xf4] sm:$0xf]
    %v88 = vld [vmem:[%s1 + $0xf8] sm:$0xf]
    %v89 = vld [vmem:[%s1 + $0xfc] sm:$0xf]
    %v90 = vld [vmem:[%s0] sm:$0xf]
    %v91 = vld [vmem:[%s0 + $0x4] sm:$0xf]
    %v92 = vld [vmem:[%s0 + $0x8] sm:$0xf]
    %v93 = vld [vmem:[%s2] sm:$0xff]
    %v94 = vld [vmem:[%s2 + $0x8] sm:$0xff]
    %v95 = vld [vmem:[%s2 + $0x10] sm:$0xff]
    %v96 = vld [vmem:[%s2 + $0x18] sm:$0xff]
    %v97 = vld [vmem:[%s2 + $0x20] sm:$0xff]
    %v98 = vld [vmem:[%s2 + $0x28] sm:$0xff]
    %v99 = vld [vmem:[%s2 + $0x30] sm:$0xff]
    %v100 = vld [vmem:[%s2 + $0x38] sm:$0xff]
    %v101 = vld [vmem:[%s2 + $0x40] sm:$0xff]
    %v102 = vld [vmem:[%s2 + $0x48] sm:$0xff]
    %v103 = vld [vmem:[%s2 + $0x50] sm:$0xff]
    %v104 = vld [vmem:[%s2 + $0x58] sm:$0xff]
    %v105 = vld [vmem:[%s2 + $0x60] sm:$0xff]
    %v106 = vld [vmem:[%s2 + $0x68] sm:$0xff]
    %v107 = vld [vmem:[%s2 + $0x70] sm:$0xff]
    %v108 = vld [vmem:[%s2 + $0x78] sm:$0xff]
    %v109 = vld [vmem:[%s2 + $0x80] sm:$0xff]
    %v110 = vld [vmem:[%s2 + $0x88] sm:$0xff]
    %v111 = vld [vmem:[%s2 + $0x90] sm:$0xff]
    %v112 = vld [vmem:[%s2 + $0x98] sm:$0xff]
    %v113 = vld [vmem:[%s2 + $0xa0] sm:$0xff]
    %v114 = vld [vmem:[%s2 + $0xa8] sm:$0xff]
    %v115 = vld [vmem:[%s2 + $0xb0] sm:$0xff]
    %v116 = vld [vmem:[%s2 + $0xb8] sm:$0xff]
    %v117 = vld [vmem:[%s2 + $0xc0] sm:$0xff]
    %v118 = vld [vmem:[%s2 + $0xc8] sm:$0xff]
    %v119 = vld [vmem:[%s2 + $0xd0] sm:$0xff]
    %v120 = vld [vmem:[%s2 + $0xd8] sm:$0xff]
    %v121 = vld [vmem:[%s2 + $0xe0] sm:$0xff]
    %v122 = vld [vmem:[%s2 + $0xe8] sm:$0xff]
    %v123 = vld [vmem:[%s2 + $0xf0] sm:$0xff]
    %v124 = vld [vmem:[%s2 + $0xf8] sm:$0xff]
    %v125 = vld [vmem:[%s2 + $0x100] sm:$0xff]
    %v126 = vld [vmem:[%s2 + $0x108] sm:$0xff]
    %v127 = vld [vmem:[%s2 + $0x110] sm:$0xff]
    %v128 = vld [vmem:[%s2 + $0x118] sm:$0xff]
    %v129 = vld [vmem:[%s2 + $0x120] sm:$0xff]
    %v130 = vld [vmem:[%s2 + $0x128] sm:$0xff]
    %v131 = vld [vmem:[%s2 + $0x130] sm:$0xff]
    %v132 = vld [vmem:[%s2 + $0x138] sm:$0xff]
    %v133 = vld [vmem:[%s2 + $0x140] sm:$0xff]
    %v134 = vld [vmem:[%s2 + $0x148] sm:$0xff]
    %v135 = vld [vmem:[%s2 + $0x150] sm:$0xff]
    %v136 = vld [vmem:[%s2 + $0x158] sm:$0xff]
    %v137 = vld [vmem:[%s2 + $0x160] sm:$0xff]
    %v138 = vld [vmem:[%s2 + $0x168] sm:$0xff]
    %v139 = vld [vmem:[%s2 + $0x170] sm:$0xff]
    %v140 = vld [vmem:[%s2 + $0x178] sm:$0xff]
    %v141 = vld [vmem:[%s2 + $0x180] sm:$0xff]
    %v142 = vld [vmem:[%s2 + $0x188] sm:$0xff]
    %v143 = vld [vmem:[%s2 + $0x190] sm:$0xff]
    %v144 = vld [vmem:[%s2 + $0x198] sm:$0xff]
    %v145 = vld [vmem:[%s2 + $0x1a0] sm:$0xff]
    %v146 = vld [vmem:[%s2 + $0x1a8] sm:$0xff]
    %v147 = vld [vmem:[%s2 + $0x1b0] sm:$0xff]
    %v148 = vld [vmem:[%s2 + $0x1b8] sm:$0xff]
    %v149 = vld [vmem:[%s2 + $0x1c0] sm:$0xff]
    %v150 = vld [vmem:[%s2 + $0x1c8] sm:$0xff]
    %v151 = vld [vmem:[%s2 + $0x1d0] sm:$0xff]
    %v152 = vld [vmem:[%s2 + $0x1d8] sm:$0xff]
    %v153 = vld [vmem:[%s2 + $0x1e0] sm:$0xff]
    %v154 = vld [vmem:[%s2 + $0x1e8] sm:$0xff]
    %v155 = vld [vmem:[%s2 + $0x1f0] sm:$0xff]
    %v156 = vld [vmem:[%s2 + $0x1f8] sm:$0xff]
    %158 = vset.pattern.permute.xlu0 0
    %159 = vperm.xlu0 %158, %v93
    %v160 = vpop.permute.xlu0 %159
    %163 = vset.pattern.permute.xlu0 0
    %164 = vperm.xlu0 %163, %v94
    %v165 = vpop.permute.xlu0 %164
    %168 = vset.pattern.permute.xlu0 0
    %169 = vperm.xlu0 %168, %v95
    %v170 = vpop.permute.xlu0 %169
    %173 = vset.pattern.permute.xlu0 0
    %174 = vperm.xlu0 %173, %v96
    %v175 = vpop.permute.xlu0 %174
    %178 = vset.pattern.permute.xlu0 0
    %179 = vperm.xlu0 %178, %v97
    %v180 = vpop.permute.xlu0 %179
    %183 = vset.pattern.permute.xlu0 0
    %184 = vperm.xlu0 %183, %v98
    %v185 = vpop.permute.xlu0 %184
    %188 = vset.pattern.permute.xlu0 0
    %189 = vperm.xlu0 %188, %v99
    %v190 = vpop.permute.xlu0 %189
    %193 = vset.pattern.permute.xlu0 0
    %194 = vperm.xlu0 %193, %v100
    %v195 = vpop.permute.xlu0 %194
    %198 = vset.pattern.permute.xlu0 0
    %199 = vperm.xlu0 %198, %v101
    %v200 = vpop.permute.xlu0 %199
    %203 = vset.pattern.permute.xlu0 0
    %204 = vperm.xlu0 %203, %v102
    %v205 = vpop.permute.xlu0 %204
    %208 = vset.pattern.permute.xlu0 0
    %209 = vperm.xlu0 %208, %v103
    %v210 = vpop.permute.xlu0 %209
    %213 = vset.pattern.permute.xlu0 0
    %214 = vperm.xlu0 %213, %v104
    %v215 = vpop.permute.xlu0 %214
    %218 = vset.pattern.permute.xlu0 0
    %219 = vperm.xlu0 %218, %v105
    %v220 = vpop.permute.xlu0 %219
    %223 = vset.pattern.permute.xlu0 0
    %224 = vperm.xlu0 %223, %v106
    %v225 = vpop.permute.xlu0 %224
    %228 = vset.pattern.permute.xlu0 0
    %229 = vperm.xlu0 %228, %v107
    %v230 = vpop.permute.xlu0 %229
    %233 = vset.pattern.permute.xlu0 0
    %234 = vperm.xlu0 %233, %v108
    %v235 = vpop.permute.xlu0 %234
    %238 = vset.pattern.permute.xlu0 0
    %239 = vperm.xlu0 %238, %v109
    %v240 = vpop.permute.xlu0 %239
    %243 = vset.pattern.permute.xlu0 0
    %244 = vperm.xlu0 %243, %v110
    %v245 = vpop.permute.xlu0 %244
    %248 = vset.pattern.permute.xlu0 0
    %249 = vperm.xlu0 %248, %v111
    %v250 = vpop.permute.xlu0 %249
    %253 = vset.pattern.permute.xlu0 0
    %254 = vperm.xlu0 %253, %v112
    %v255 = vpop.permute.xlu0 %254
    %258 = vset.pattern.permute.xlu0 0
    %259 = vperm.xlu0 %258, %v113
    %v260 = vpop.permute.xlu0 %259
    %263 = vset.pattern.permute.xlu0 0
    %264 = vperm.xlu0 %263, %v114
    %v265 = vpop.permute.xlu0 %264
    %268 = vset.pattern.permute.xlu0 0
    %269 = vperm.xlu0 %268, %v115
    %v270 = vpop.permute.xlu0 %269
    %273 = vset.pattern.permute.xlu0 0
    %274 = vperm.xlu0 %273, %v116
    %v275 = vpop.permute.xlu0 %274
    %278 = vset.pattern.permute.xlu0 0
    %279 = vperm.xlu0 %278, %v117
    %v280 = vpop.permute.xlu0 %279
    %283 = vset.pattern.permute.xlu0 0
    %284 = vperm.xlu0 %283, %v118
    %v285 = vpop.permute.xlu0 %284
    %288 = vset.pattern.permute.xlu0 0
    %289 = vperm.xlu0 %288, %v119
    %v290 = vpop.permute.xlu0 %289
    %293 = vset.pattern.permute.xlu0 0
    %294 = vperm.xlu0 %293, %v120
    %v295 = vpop.permute.xlu0 %294
    %298 = vset.pattern.permute.xlu0 0
    %299 = vperm.xlu0 %298, %v121
    %v300 = vpop.permute.xlu0 %299
    %303 = vset.pattern.permute.xlu0 0
    %304 = vperm.xlu0 %303, %v122
    %v305 = vpop.permute.xlu0 %304
    %308 = vset.pattern.permute.xlu0 0
    %309 = vperm.xlu0 %308, %v123
    %v310 = vpop.permute.xlu0 %309
    %313 = vset.pattern.permute.xlu0 0
    %314 = vperm.xlu0 %313, %v124
    %v315 = vpop.permute.xlu0 %314
    %318 = vset.pattern.permute.xlu0 0
    %319 = vperm.xlu0 %318, %v125
    %v320 = vpop.permute.xlu0 %319
    %323 = vset.pattern.permute.xlu0 0
    %324 = vperm.xlu0 %323, %v126
    %v325 = vpop.permute.xlu0 %324
    %328 = vset.pattern.permute.xlu0 0
    %329 = vperm.xlu0 %328, %v127
    %v330 = vpop.permute.xlu0 %329
    %333 = vset.pattern.permute.xlu0 0
    %334 = vperm.xlu0 %333, %v128
    %v335 = vpop.permute.xlu0 %334
    %338 = vset.pattern.permute.xlu0 0
    %339 = vperm.xlu0 %338, %v129
    %v340 = vpop.permute.xlu0 %339
    %343 = vset.pattern.permute.xlu0 0
    %344 = vperm.xlu0 %343, %v130
    %v345 = vpop.permute.xlu0 %344
    %348 = vset.pattern.permute.xlu0 0
    %349 = vperm.xlu0 %348, %v131
    %v350 = vpop.permute.xlu0 %349
    %353 = vset.pattern.permute.xlu0 0
    %354 = vperm.xlu0 %353, %v132
    %v355 = vpop.permute.xlu0 %354
    %358 = vset.pattern.permute.xlu0 0
    %359 = vperm.xlu0 %358, %v133
    %v360 = vpop.permute.xlu0 %359
    %363 = vset.pattern.permute.xlu0 0
    %364 = vperm.xlu0 %363, %v134
    %v365 = vpop.permute.xlu0 %364
    %368 = vset.pattern.permute.xlu0 0
    %369 = vperm.xlu0 %368, %v135
    %v370 = vpop.permute.xlu0 %369
    %373 = vset.pattern.permute.xlu0 0
    %374 = vperm.xlu0 %373, %v136
    %v375 = vpop.permute.xlu0 %374
    %378 = vset.pattern.permute.xlu0 0
    %379 = vperm.xlu0 %378, %v137
    %v380 = vpop.permute.xlu0 %379
    %383 = vset.pattern.permute.xlu0 0
    %384 = vperm.xlu0 %383, %v138
    %v385 = vpop.permute.xlu0 %384
    %388 = vset.pattern.permute.xlu0 0
    %389 = vperm.xlu0 %388, %v139
    %v390 = vpop.permute.xlu0 %389
    %393 = vset.pattern.permute.xlu0 0
    %394 = vperm.xlu0 %393, %v140
    %v395 = vpop.permute.xlu0 %394
    %398 = vset.pattern.permute.xlu0 0
    %399 = vperm.xlu0 %398, %v141
    %v400 = vpop.permute.xlu0 %399
    %403 = vset.pattern.permute.xlu0 0
    %404 = vperm.xlu0 %403, %v142
    %v405 = vpop.permute.xlu0 %404
    %408 = vset.pattern.permute.xlu0 0
    %409 = vperm.xlu0 %408, %v143
    %v410 = vpop.permute.xlu0 %409
    %413 = vset.pattern.permute.xlu0 0
    %414 = vperm.xlu0 %413, %v144
    %v415 = vpop.permute.xlu0 %414
    %418 = vset.pattern.permute.xlu0 0
    %419 = vperm.xlu0 %418, %v145
    %v420 = vpop.permute.xlu0 %419
    %423 = vset.pattern.permute.xlu0 0
    %424 = vperm.xlu0 %423, %v146
    %v425 = vpop.permute.xlu0 %424
    %428 = vset.pattern.permute.xlu0 0
    %429 = vperm.xlu0 %428, %v147
    %v430 = vpop.permute.xlu0 %429
    %433 = vset.pattern.permute.xlu0 0
    %434 = vperm.xlu0 %433, %v148
    %v435 = vpop.permute.xlu0 %434
    %438 = vset.pattern.permute.xlu0 0
    %439 = vperm.xlu0 %438, %v149
    %v440 = vpop.permute.xlu0 %439
    %443 = vset.pattern.permute.xlu0 0
    %444 = vperm.xlu0 %443, %v150
    %v445 = vpop.permute.xlu0 %444
    %448 = vset.pattern.permute.xlu0 0
    %449 = vperm.xlu0 %448, %v151
    %v450 = vpop.permute.xlu0 %449
    %453 = vset.pattern.permute.xlu0 0
    %454 = vperm.xlu0 %453, %v152
    %v455 = vpop.permute.xlu0 %454
    %458 = vset.pattern.permute.xlu0 0
    %459 = vperm.xlu0 %458, %v153
    %v460 = vpop.permute.xlu0 %459
    %463 = vset.pattern.permute.xlu0 0
    %464 = vperm.xlu0 %463, %v154
    %v465 = vpop.permute.xlu0 %464
    %468 = vset.pattern.permute.xlu0 0
    %469 = vperm.xlu0 %468, %v155
    %v470 = vpop.permute.xlu0 %469
    %473 = vset.pattern.permute.xlu0 0
    %474 = vperm.xlu0 %473, %v156
    %v475 = vpop.permute.xlu0 %474
    %v541 = vunpack.c.l.b16 %v26
    %v542 = vunpack.c.l.b16 %v27
    %v543 = vunpack.c.l.b16 %v28
    %v544 = vunpack.c.l.b16 %v29
    %v545 = vunpack.c.l.b16 %v30
    %v546 = vunpack.c.l.b16 %v31
    %v547 = vunpack.c.l.b16 %v32
    %v548 = vunpack.c.l.b16 %v33
    %v549 = vunpack.c.l.b16 %v34
    %v550 = vunpack.c.l.b16 %v35
    %v551 = vunpack.c.l.b16 %v36
    %v552 = vunpack.c.l.b16 %v37
    %v553 = vunpack.c.l.b16 %v38
    %v554 = vunpack.c.l.b16 %v39
    %v555 = vunpack.c.l.b16 %v40
    %v556 = vunpack.c.l.b16 %v41
    %v557 = vunpack.c.l.b16 %v42
    %v558 = vunpack.c.l.b16 %v43
    %v559 = vunpack.c.l.b16 %v44
    %v560 = vunpack.c.l.b16 %v45
    %v561 = vunpack.c.l.b16 %v46
    %v562 = vunpack.c.l.b16 %v47
    %v563 = vunpack.c.l.b16 %v48
    %v564 = vunpack.c.l.b16 %v49
    %v565 = vunpack.c.l.b16 %v50
    %v566 = vunpack.c.l.b16 %v51
    %v567 = vunpack.c.l.b16 %v52
    %v568 = vunpack.c.l.b16 %v53
    %v569 = vunpack.c.l.b16 %v54
    %v570 = vunpack.c.l.b16 %v55
    %v571 = vunpack.c.l.b16 %v56
    %v572 = vunpack.c.l.b16 %v57
    %v573 = vunpack.c.l.b16 %v58
    %v574 = vunpack.c.l.b16 %v59
    %v575 = vunpack.c.l.b16 %v60
    %v576 = vunpack.c.l.b16 %v61
    %v577 = vunpack.c.l.b16 %v62
    %v578 = vunpack.c.l.b16 %v63
    %v579 = vunpack.c.l.b16 %v64
    %v580 = vunpack.c.l.b16 %v65
    %v581 = vunpack.c.l.b16 %v66
    %v582 = vunpack.c.l.b16 %v67
    %v583 = vunpack.c.l.b16 %v68
    %v584 = vunpack.c.l.b16 %v69
    %v585 = vunpack.c.l.b16 %v70
    %v586 = vunpack.c.l.b16 %v71
    %v587 = vunpack.c.l.b16 %v72
    %v588 = vunpack.c.l.b16 %v73
    %v589 = vunpack.c.l.b16 %v74
    %v590 = vunpack.c.l.b16 %v75
    %v591 = vunpack.c.l.b16 %v76
    %v592 = vunpack.c.l.b16 %v77
    %v593 = vunpack.c.l.b16 %v78
    %v594 = vunpack.c.l.b16 %v79
    %v595 = vunpack.c.l.b16 %v80
    %v596 = vunpack.c.l.b16 %v81
    %v597 = vunpack.c.l.b16 %v82
    %v598 = vunpack.c.l.b16 %v83
    %v599 = vunpack.c.l.b16 %v84
    %v600 = vunpack.c.l.b16 %v85
    %v601 = vunpack.c.l.b16 %v86
    %v602 = vunpack.c.l.b16 %v87
    %v603 = vunpack.c.l.b16 %v88
    %v604 = vunpack.c.l.b16 %v89
    %v605 = vpack.c.b16 %v542, %v541
    %v606 = vpack.c.b16 %v544, %v543
    %v607 = vpack.c.b16 %v546, %v545
    %v608 = vpack.c.b16 %v548, %v547
    %v609 = vpack.c.b16 %v550, %v549
    %v610 = vpack.c.b16 %v552, %v551
    %v611 = vpack.c.b16 %v554, %v553
    %v612 = vpack.c.b16 %v556, %v555
    %v613 = vpack.c.b16 %v558, %v557
    %v614 = vpack.c.b16 %v560, %v559
    %v615 = vpack.c.b16 %v562, %v561
    %v616 = vpack.c.b16 %v564, %v563
    %v617 = vpack.c.b16 %v566, %v565
    %v618 = vpack.c.b16 %v568, %v567
    %v619 = vpack.c.b16 %v570, %v569
    %v620 = vpack.c.b16 %v572, %v571
    %v621 = vpack.c.b16 %v574, %v573
    %v622 = vpack.c.b16 %v576, %v575
    %v623 = vpack.c.b16 %v578, %v577
    %v624 = vpack.c.b16 %v580, %v579
    %v625 = vpack.c.b16 %v582, %v581
    %v626 = vpack.c.b16 %v584, %v583
    %v627 = vpack.c.b16 %v586, %v585
    %v628 = vpack.c.b16 %v588, %v587
    %v629 = vpack.c.b16 %v590, %v589
    %v630 = vpack.c.b16 %v592, %v591
    %v631 = vpack.c.b16 %v594, %v593
    %v632 = vpack.c.b16 %v596, %v595
    %v633 = vpack.c.b16 %v598, %v597
    %v634 = vpack.c.b16 %v600, %v599
    %v635 = vpack.c.b16 %v602, %v601
    %v636 = vpack.c.b16 %v604, %v603
    %v640 = vunpack.c.l.b16 %v90
    %v641 = vunpack.c.l.b16 %v91
    %v642 = vunpack.c.l.b16 %v92
    %v643 = vpack.c.b16 %v641, %v640
    %v644 = vpack.c.b16 %v642, %v642
    %vm646 = vcmask 195584
    %v648 = vsel %vm646, %v605, 0
    %v651 = vsel %vm646, %v606, 0
    %v654 = vsel %vm646, %v607, 0
    %v657 = vsel %vm646, %v608, 0
    %v660 = vsel %vm646, %v609, 0
    %v663 = vsel %vm646, %v610, 0
    %v666 = vsel %vm646, %v611, 0
    %v669 = vsel %vm646, %v612, 0
    %v672 = vsel %vm646, %v613, 0
    %v675 = vsel %vm646, %v614, 0
    %v678 = vsel %vm646, %v615, 0
    %v681 = vsel %vm646, %v616, 0
    %v684 = vsel %vm646, %v617, 0
    %v687 = vsel %vm646, %v618, 0
    %v690 = vsel %vm646, %v619, 0
    %v693 = vsel %vm646, %v620, 0
    %v696 = vsel %vm646, %v621, 0
    %v699 = vsel %vm646, %v622, 0
    %v702 = vsel %vm646, %v623, 0
    %v705 = vsel %vm646, %v624, 0
    %v708 = vsel %vm646, %v625, 0
    %v711 = vsel %vm646, %v626, 0
    %v714 = vsel %vm646, %v627, 0
    %v717 = vsel %vm646, %v628, 0
    %v720 = vsel %vm646, %v629, 0
    %v723 = vsel %vm646, %v630, 0
    %v726 = vsel %vm646, %v631, 0
    %v729 = vsel %vm646, %v632, 0
    %v732 = vsel %vm646, %v633, 0
    %v735 = vsel %vm646, %v634, 0
    %v738 = vsel %vm646, %v635, 0
    %v741 = vsel %vm646, %v636, 0
    %vm743 = vcmask 1043456
    %v745 = vsel %vm743, %v644, 0
    %747 = vmatprep.subr.bf16.mxu0 0
    %748 = vmatpush1.bf16.msra.mxu0 %v643
    %749 = vmatprep.subr.bf16.mxu0 0
    %750 = vmatpush1.bf16.msra.mxu0 %v745
    %751 = vmatprep.subr.bf16.mxu0 0
    %752 = vmatpush1.bf16.msra.mxu0 0
    %753 = vmatprep.subr.bf16.mxu0 0
    %754 = vmatpush1.bf16.msra.mxu0 0
    %755 = vmatprep.subr.bf16.mxu0 0
    %756 = vmatpush1.bf16.msra.mxu0 0
    %757 = vmatprep.subr.bf16.mxu0 0
    %758 = vmatpush1.bf16.msra.mxu0 0
    %759 = vmatprep.subr.bf16.mxu0 0
    %760 = vmatpush1.bf16.msra.mxu0 0
    %761 = vmatprep.subr.bf16.mxu0 0
    %762 = vmatpush1.bf16.msra.mxu0 0
    %763 = vmatprep.subr.bf16.mxu0 0
    %764 = vmatpush1.bf16.msra.mxu0 0
    %765 = vmatprep.subr.bf16.mxu0 0
    %766 = vmatpush1.bf16.msra.mxu0 0
    %767 = vmatprep.subr.bf16.mxu0 0
    %768 = vmatpush1.bf16.msra.mxu0 0
    %769 = vmatprep.subr.bf16.mxu0 0
    %770 = vmatpush1.bf16.msra.mxu0 0
    %771 = vmatprep.subr.bf16.mxu0 0
    %772 = vmatpush1.bf16.msra.mxu0 0
    %773 = vmatprep.subr.bf16.mxu0 0
    %774 = vmatpush1.bf16.msra.mxu0 0
    %775 = vmatprep.subr.bf16.mxu0 0
    %776 = vmatpush1.bf16.msra.mxu0 0
    %777 = vmatprep.subr.bf16.mxu0 0
    %778 = vmatpush1.bf16.msra.mxu0 0
    %779 = vmatprep.mubr.bf16.mxu0 0
    %780 = vmatmul.mubr.bf16.gmra.mrb[0].mxu0 %v648
    %v781 = vpop.f32.mrb[0].mxu0
    %v782 = vadd.f32 %v160, %v781
    %v783 = vpop.f32.mrb[0].mxu0
    %v784 = vpop.f32.mrb[0].mxu0
    %v785 = vadd.f32 %v165, %v784
    %v786 = vpop.f32.mrb[0].mxu0
    %787 = vmatprep.mubr.bf16.mxu0 0
    %788 = vmatmul.mubr.bf16.gmra.mrb[0].mxu0 %v651
    %v789 = vpop.f32.mrb[0].mxu0
    %v790 = vadd.f32 %v170, %v789
    %v791 = vpop.f32.mrb[0].mxu0
    %v792 = vpop.f32.mrb[0].mxu0
    %v793 = vadd.f32 %v175, %v792
    %v794 = vpop.f32.mrb[0].mxu0
    %795 = vmatprep.mubr.bf16.mxu0 0
    %796 = vmatmul.mubr.bf16.gmra.mrb[0].mxu0 %v654
    %v797 = vpop.f32.mrb[0].mxu0
    %v798 = vadd.f32 %v180, %v797
    %v799 = vpop.f32.mrb[0].mxu0
    %v800 = vpop.f32.mrb[0].mxu0
    %v801 = vadd.f32 %v185, %v800
    %v802 = vpop.f32.mrb[0].mxu0
    %803 = vmatprep.mubr.bf16.mxu0 0
    %804 = vmatmul.mubr.bf16.gmra.mrb[0].mxu0 %v657
    %v805 = vpop.f32.mrb[0].mxu0
    %v806 = vadd.f32 %v190, %v805
    %v807 = vpop.f32.mrb[0].mxu0
    %v808 = vpop.f32.mrb[0].mxu0
    %v809 = vadd.f32 %v195, %v808
    %v810 = vpop.f32.mrb[0].mxu0
    %811 = vmatprep.mubr.bf16.mxu0 0
    %812 = vmatmul.mubr.bf16.gmra.mrb[0].mxu0 %v660
    %v813 = vpop.f32.mrb[0].mxu0
    %v814 = vadd.f32 %v200, %v813
    %v815 = vpop.f32.mrb[0].mxu0
    %v816 = vpop.f32.mrb[0].mxu0
    %v817 = vadd.f32 %v205, %v816
    %v818 = vpop.f32.mrb[0].mxu0
    %819 = vmatprep.mubr.bf16.mxu0 0
    %820 = vmatmul.mubr.bf16.gmra.mrb[0].mxu0 %v663
    %v821 = vpop.f32.mrb[0].mxu0
    %v822 = vadd.f32 %v210, %v821
    %v823 = vpop.f32.mrb[0].mxu0
    %v824 = vpop.f32.mrb[0].mxu0
    %v825 = vadd.f32 %v215, %v824
    %v826 = vpop.f32.mrb[0].mxu0
    %827 = vmatprep.mubr.bf16.mxu0 0
    %828 = vmatmul.mubr.bf16.gmra.mrb[0].mxu0 %v666
    %v829 = vpop.f32.mrb[0].mxu0
    %v830 = vadd.f32 %v220, %v829
    %v831 = vpop.f32.mrb[0].mxu0
    %v832 = vpop.f32.mrb[0].mxu0
    %v833 = vadd.f32 %v225, %v832
    %v834 = vpop.f32.mrb[0].mxu0
    %835 = vmatprep.mubr.bf16.mxu0 0
    %836 = vmatmul.mubr.bf16.gmra.mrb[0].mxu0 %v669
    %v837 = vpop.f32.mrb[0].mxu0
    %v838 = vadd.f32 %v230, %v837
    %v839 = vpop.f32.mrb[0].mxu0
    %v840 = vpop.f32.mrb[0].mxu0
    %v841 = vadd.f32 %v235, %v840
    %v842 = vpop.f32.mrb[0].mxu0
    %843 = vmatprep.mubr.bf16.mxu0 0
    %844 = vmatmul.mubr.bf16.gmra.mrb[0].mxu0 %v672
    %v845 = vpop.f32.mrb[0].mxu0
    %v846 = vadd.f32 %v240, %v845
    %v847 = vpop.f32.mrb[0].mxu0
    %v848 = vpop.f32.mrb[0].mxu0
    %v849 = vadd.f32 %v245, %v848
    %v850 = vpop.f32.mrb[0].mxu0
    %851 = vmatprep.mubr.bf16.mxu0 0
    %852 = vmatmul.mubr.bf16.gmra.mrb[0].mxu0 %v675
    %v853 = vpop.f32.mrb[0].mxu0
    %v854 = vadd.f32 %v250, %v853
    %v855 = vpop.f32.mrb[0].mxu0
    %v856 = vpop.f32.mrb[0].mxu0
    %v857 = vadd.f32 %v255, %v856
    %v858 = vpop.f32.mrb[0].mxu0
    %859 = vmatprep.mubr.bf16.mxu0 0
    %860 = vmatmul.mubr.bf16.gmra.mrb[0].mxu0 %v678
    %v861 = vpop.f32.mrb[0].mxu0
    %v862 = vadd.f32 %v260, %v861
    %v863 = vpop.f32.mrb[0].mxu0
    %v864 = vpop.f32.mrb[0].mxu0
    %v865 = vadd.f32 %v265, %v864
    %v866 = vpop.f32.mrb[0].mxu0
    %867 = vmatprep.mubr.bf16.mxu0 0
    %868 = vmatmul.mubr.bf16.gmra.mrb[0].mxu0 %v681
    %v869 = vpop.f32.mrb[0].mxu0
    %v870 = vadd.f32 %v270, %v869
    %v871 = vpop.f32.mrb[0].mxu0
    %v872 = vpop.f32.mrb[0].mxu0
    %v873 = vadd.f32 %v275, %v872
    %v874 = vpop.f32.mrb[0].mxu0
    %875 = vmatprep.mubr.bf16.mxu0 0
    %876 = vmatmul.mubr.bf16.gmra.mrb[0].mxu0 %v684
    %v877 = vpop.f32.mrb[0].mxu0
    %v878 = vadd.f32 %v280, %v877
    %v879 = vpop.f32.mrb[0].mxu0
    %v880 = vpop.f32.mrb[0].mxu0
    %v881 = vadd.f32 %v285, %v880
    %v882 = vpop.f32.mrb[0].mxu0
    %883 = vmatprep.mubr.bf16.mxu0 0
    %884 = vmatmul.mubr.bf16.gmra.mrb[0].mxu0 %v687
    %v885 = vpop.f32.mrb[0].mxu0
    %v886 = vadd.f32 %v290, %v885
    %v887 = vpop.f32.mrb[0].mxu0
    %v888 = vpop.f32.mrb[0].mxu0
    %v889 = vadd.f32 %v295, %v888
    %v890 = vpop.f32.mrb[0].mxu0
    %891 = vmatprep.mubr.bf16.mxu0 0
    %892 = vmatmul.mubr.bf16.gmra.mrb[0].mxu0 %v690
    %v893 = vpop.f32.mrb[0].mxu0
    %v894 = vadd.f32 %v300, %v893
    %v895 = vpop.f32.mrb[0].mxu0
    %v896 = vpop.f32.mrb[0].mxu0
    %v897 = vadd.f32 %v305, %v896
    %v898 = vpop.f32.mrb[0].mxu0
    %899 = vmatprep.mubr.bf16.mxu0 0
    %900 = vmatmul.mubr.bf16.gmra.mrb[0].mxu0 %v693
    %v901 = vpop.f32.mrb[0].mxu0
    %v902 = vadd.f32 %v310, %v901
    %v903 = vpop.f32.mrb[0].mxu0
    %v904 = vpop.f32.mrb[0].mxu0
    %v905 = vadd.f32 %v315, %v904
    %v906 = vpop.f32.mrb[0].mxu0
    %907 = vmatprep.mubr.bf16.mxu0 0
    %908 = vmatmul.mubr.bf16.gmra.mrb[0].mxu0 %v696
    %v909 = vpop.f32.mrb[0].mxu0
    %v910 = vadd.f32 %v320, %v909
    %v911 = vpop.f32.mrb[0].mxu0
    %v912 = vpop.f32.mrb[0].mxu0
    %v913 = vadd.f32 %v325, %v912
    %v914 = vpop.f32.mrb[0].mxu0
    %915 = vmatprep.mubr.bf16.mxu0 0
    %916 = vmatmul.mubr.bf16.gmra.mrb[0].mxu0 %v699
    %v917 = vpop.f32.mrb[0].mxu0
    %v918 = vadd.f32 %v330, %v917
    %v919 = vpop.f32.mrb[0].mxu0
    %v920 = vpop.f32.mrb[0].mxu0
    %v921 = vadd.f32 %v335, %v920
    %v922 = vpop.f32.mrb[0].mxu0
    %923 = vmatprep.mubr.bf16.mxu0 0
    %924 = vmatmul.mubr.bf16.gmra.mrb[0].mxu0 %v702
    %v925 = vpop.f32.mrb[0].mxu0
    %v926 = vadd.f32 %v340, %v925
    %v927 = vpop.f32.mrb[0].mxu0
    %v928 = vpop.f32.mrb[0].mxu0
    %v929 = vadd.f32 %v345, %v928
    %v930 = vpop.f32.mrb[0].mxu0
    %931 = vmatprep.mubr.bf16.mxu0 0
    %932 = vmatmul.mubr.bf16.gmra.mrb[0].mxu0 %v705
    %v933 = vpop.f32.mrb[0].mxu0
    %v934 = vadd.f32 %v350, %v933
    %v935 = vpop.f32.mrb[0].mxu0
    %v936 = vpop.f32.mrb[0].mxu0
    %v937 = vadd.f32 %v355, %v936
    %v938 = vpop.f32.mrb[0].mxu0
    %939 = vmatprep.mubr.bf16.mxu0 0
    %940 = vmatmul.mubr.bf16.gmra.mrb[0].mxu0 %v708
    %v941 = vpop.f32.mrb[0].mxu0
    %v942 = vadd.f32 %v360, %v941
    %v943 = vpop.f32.mrb[0].mxu0
    %v944 = vpop.f32.mrb[0].mxu0
    %v945 = vadd.f32 %v365, %v944
    %v946 = vpop.f32.mrb[0].mxu0
    %947 = vmatprep.mubr.bf16.mxu0 0
    %948 = vmatmul.mubr.bf16.gmra.mrb[0].mxu0 %v711
    %v949 = vpop.f32.mrb[0].mxu0
    %v950 = vadd.f32 %v370, %v949
    %v951 = vpop.f32.mrb[0].mxu0
    %v952 = vpop.f32.mrb[0].mxu0
    %v953 = vadd.f32 %v375, %v952
    %v954 = vpop.f32.mrb[0].mxu0
    %955 = vmatprep.mubr.bf16.mxu0 0
    %956 = vmatmul.mubr.bf16.gmra.mrb[0].mxu0 %v714
    %v957 = vpop.f32.mrb[0].mxu0
    %v958 = vadd.f32 %v380, %v957
    %v959 = vpop.f32.mrb[0].mxu0
    %v960 = vpop.f32.mrb[0].mxu0
    %v961 = vadd.f32 %v385, %v960
    %v962 = vpop.f32.mrb[0].mxu0
    %963 = vmatprep.mubr.bf16.mxu0 0
    %964 = vmatmul.mubr.bf16.gmra.mrb[0].mxu0 %v717
    %v965 = vpop.f32.mrb[0].mxu0
    %v966 = vadd.f32 %v390, %v965
    %v967 = vpop.f32.mrb[0].mxu0
    %v968 = vpop.f32.mrb[0].mxu0
    %v969 = vadd.f32 %v395, %v968
    %v970 = vpop.f32.mrb[0].mxu0
    %971 = vmatprep.mubr.bf16.mxu0 0
    %972 = vmatmul.mubr.bf16.gmra.mrb[0].mxu0 %v720
    %v973 = vpop.f32.mrb[0].mxu0
    %v974 = vadd.f32 %v400, %v973
    %v975 = vpop.f32.mrb[0].mxu0
    %v976 = vpop.f32.mrb[0].mxu0
    %v977 = vadd.f32 %v405, %v976
    %v978 = vpop.f32.mrb[0].mxu0
    %979 = vmatprep.mubr.bf16.mxu0 0
    %980 = vmatmul.mubr.bf16.gmra.mrb[0].mxu0 %v723
    %v981 = vpop.f32.mrb[0].mxu0
    %v982 = vadd.f32 %v410, %v981
    %v983 = vpop.f32.mrb[0].mxu0
    %v984 = vpop.f32.mrb[0].mxu0
    %v985 = vadd.f32 %v415, %v984
    %v986 = vpop.f32.mrb[0].mxu0
    %987 = vmatprep.mubr.bf16.mxu0 0
    %988 = vmatmul.mubr.bf16.gmra.mrb[0].mxu0 %v726
    %v989 = vpop.f32.mrb[0].mxu0
    %v990 = vadd.f32 %v420, %v989
    %v991 = vpop.f32.mrb[0].mxu0
    %v992 = vpop.f32.mrb[0].mxu0
    %v993 = vadd.f32 %v425, %v992
    %v994 = vpop.f32.mrb[0].mxu0
    %995 = vmatprep.mubr.bf16.mxu0 0
    %996 = vmatmul.mubr.bf16.gmra.mrb[0].mxu0 %v729
    %v997 = vpop.f32.mrb[0].mxu0
    %v998 = vadd.f32 %v430, %v997
    %v999 = vpop.f32.mrb[0].mxu0
    %v1000 = vpop.f32.mrb[0].mxu0
    %v1001 = vadd.f32 %v435, %v1000
    %v1002 = vpop.f32.mrb[0].mxu0
    %1003 = vmatprep.mubr.bf16.mxu0 0
    %1004 = vmatmul.mubr.bf16.gmra.mrb[0].mxu0 %v732
    %v1005 = vpop.f32.mrb[0].mxu0
    %v1006 = vadd.f32 %v440, %v1005
    %v1007 = vpop.f32.mrb[0].mxu0
    %v1008 = vpop.f32.mrb[0].mxu0
    %v1009 = vadd.f32 %v445, %v1008
    %v1010 = vpop.f32.mrb[0].mxu0
    %1011 = vmatprep.mubr.bf16.mxu0 0
    %1012 = vmatmul.mubr.bf16.gmra.mrb[0].mxu0 %v735
    %v1013 = vpop.f32.mrb[0].mxu0
    %v1014 = vadd.f32 %v450, %v1013
    %v1015 = vpop.f32.mrb[0].mxu0
    %v1016 = vpop.f32.mrb[0].mxu0
    %v1017 = vadd.f32 %v455, %v1016
    %v1018 = vpop.f32.mrb[0].mxu0
    %1019 = vmatprep.mubr.bf16.mxu0 0
    %1020 = vmatmul.mubr.bf16.gmra.mrb[0].mxu0 %v738
    %v1021 = vpop.f32.mrb[0].mxu0
    %v1022 = vadd.f32 %v460, %v1021
    %v1023 = vpop.f32.mrb[0].mxu0
    %v1024 = vpop.f32.mrb[0].mxu0
    %v1025 = vadd.f32 %v465, %v1024
    %v1026 = vpop.f32.mrb[0].mxu0
    %1027 = vmatprep.mubr.bf16.mxu0 0
    %1028 = vmatmul.mubr.bf16.gmra.mrb[0].mxu0 %v741
    %v1029 = vpop.f32.mrb[0].mxu0
    %v1030 = vadd.f32 %v470, %v1029
    %v1031 = vpop.f32.mrb[0].mxu0
    %v1032 = vpop.f32.mrb[0].mxu0
    %v1033 = vadd.f32 %v475, %v1032
    %v1034 = vpop.f32.mrb[0].mxu0
    %1035 = vdwg.mxu0
    %v1036 = vmax.f32 %v782, 0.0
    %v1037 = vmax.f32 %v785, 0.0
    %v1038 = vmax.f32 %v790, 0.0
    %v1039 = vmax.f32 %v793, 0.0
    %v1040 = vmax.f32 %v798, 0.0
    %v1041 = vmax.f32 %v801, 0.0
    %v1042 = vmax.f32 %v806, 0.0
    %v1043 = vmax.f32 %v809, 0.0
    %v1044 = vmax.f32 %v814, 0.0
    %v1045 = vmax.f32 %v817, 0.0
    %v1046 = vmax.f32 %v822, 0.0
    %v1047 = vmax.f32 %v825, 0.0
    %v1048 = vmax.f32 %v830, 0.0
    %v1049 = vmax.f32 %v833, 0.0
    %v1050 = vmax.f32 %v838, 0.0
    %v1051 = vmax.f32 %v841, 0.0
    %v1052 = vmax.f32 %v846, 0.0
    %v1053 = vmax.f32 %v849, 0.0
    %v1054 = vmax.f32 %v854, 0.0
    %v1055 = vmax.f32 %v857, 0.0
    %v1056 = vmax.f32 %v862, 0.0
    %v1057 = vmax.f32 %v865, 0.0
    %v1058 = vmax.f32 %v870, 0.0
    %v1059 = vmax.f32 %v873, 0.0
    %v1060 = vmax.f32 %v878, 0.0
    %v1061 = vmax.f32 %v881, 0.0
    %v1062 = vmax.f32 %v886, 0.0
    %v1063 = vmax.f32 %v889, 0.0
    %v1064 = vmax.f32 %v894, 0.0
    %v1065 = vmax.f32 %v897, 0.0
    %v1066 = vmax.f32 %v902, 0.0
    %v1067 = vmax.f32 %v905, 0.0
    %v1068 = vld [vmem:[%s3] sm:$0xff]
    %v1069 = vld [vmem:[%s3 + $0x8] sm:$0xff]
    %v1070 = vld [vmem:[%s3 + $0x10] sm:$0xff]
    %v1071 = vld [vmem:[%s3 + $0x18] sm:$0xff]
    %v1072 = vld [vmem:[%s3 + $0x20] sm:$0xff]
    %v1073 = vld [vmem:[%s3 + $0x28] sm:$0xff]
    %v1074 = vld [vmem:[%s3 + $0x30] sm:$0xff]
    %v1075 = vld [vmem:[%s3 + $0x38] sm:$0xff]
    %v1076 = vld [vmem:[%s3 + $0x40] sm:$0xff]
    %v1077 = vld [vmem:[%s3 + $0x48] sm:$0xff]
    %v1078 = vld [vmem:[%s3 + $0x50] sm:$0xff]
    %v1079 = vld [vmem:[%s3 + $0x58] sm:$0xff]
    %v1080 = vld [vmem:[%s3 + $0x60] sm:$0xff]
    %v1081 = vld [vmem:[%s3 + $0x68] sm:$0xff]
    %v1082 = vld [vmem:[%s3 + $0x70] sm:$0xff]
    %v1083 = vld [vmem:[%s3 + $0x78] sm:$0xff]
    %v1084 = vld [vmem:[%s3 + $0x80] sm:$0xff]
    %v1085 = vld [vmem:[%s3 + $0x88] sm:$0xff]
    %v1086 = vld [vmem:[%s3 + $0x90] sm:$0xff]
    %v1087 = vld [vmem:[%s3 + $0x98] sm:$0xff]
    %v1088 = vld [vmem:[%s3 + $0xa0] sm:$0xff]
    %v1089 = vld [vmem:[%s3 + $0xa8] sm:$0xff]
    %v1090 = vld [vmem:[%s3 + $0xb0] sm:$0xff]
    %v1091 = vld [vmem:[%s3 + $0xb8] sm:$0xff]
    %v1092 = vld [vmem:[%s3 + $0xc0] sm:$0xff]
    %v1093 = vld [vmem:[%s3 + $0xc8] sm:$0xff]
    %v1094 = vld [vmem:[%s3 + $0xd0] sm:$0xff]
    %v1095 = vld [vmem:[%s3 + $0xd8] sm:$0xff]
    %v1096 = vld [vmem:[%s3 + $0xe0] sm:$0xff]
    %v1097 = vld [vmem:[%s3 + $0xe8] sm:$0xff]
    %v1098 = vld [vmem:[%s3 + $0xf0] sm:$0xff]
    %v1099 = vld [vmem:[%s3 + $0xf8] sm:$0xff]
    %v1100 = vpack.c.bf16 %v1037, %v1036
    %v1101 = vpack.c.bf16 %v1039, %v1038
    %v1102 = vpack.c.bf16 %v1041, %v1040
    %v1103 = vpack.c.bf16 %v1043, %v1042
    %v1104 = vpack.c.bf16 %v1045, %v1044
    %v1105 = vpack.c.bf16 %v1047, %v1046
    %v1106 = vpack.c.bf16 %v1049, %v1048
    %v1107 = vpack.c.bf16 %v1051, %v1050
    %v1108 = vpack.c.bf16 %v1053, %v1052
    %v1109 = vpack.c.bf16 %v1055, %v1054
    %v1110 = vpack.c.bf16 %v1057, %v1056
    %v1111 = vpack.c.bf16 %v1059, %v1058
    %v1112 = vpack.c.bf16 %v1061, %v1060
    %v1113 = vpack.c.bf16 %v1063, %v1062
    %v1114 = vpack.c.bf16 %v1065, %v1064
    %v1115 = vpack.c.bf16 %v1067, %v1066
    %v1148 = vunpack.c.l.b16 %v1068
    %v1149 = vunpack.c.h.b16 %v1068
    %v1150 = vunpack.c.l.b16 %v1069
    %v1151 = vunpack.c.h.b16 %v1069
    %v1152 = vunpack.c.l.b16 %v1070
    %v1153 = vunpack.c.h.b16 %v1070
    %v1154 = vunpack.c.l.b16 %v1071
    %v1155 = vunpack.c.h.b16 %v1071
    %v1156 = vunpack.c.l.b16 %v1072
    %v1157 = vunpack.c.h.b16 %v1072
    %v1158 = vunpack.c.l.b16 %v1073
    %v1159 = vunpack.c.h.b16 %v1073
    %v1160 = vunpack.c.l.b16 %v1074
    %v1161 = vunpack.c.h.b16 %v1074
    %v1162 = vunpack.c.l.b16 %v1075
    %v1163 = vunpack.c.h.b16 %v1075
    %v1164 = vunpack.c.l.b16 %v1076
    %v1165 = vunpack.c.h.b16 %v1076
    %v1166 = vunpack.c.l.b16 %v1077
    %v1167 = vunpack.c.h.b16 %v1077
    %v1168 = vunpack.c.l.b16 %v1078
    %v1169 = vunpack.c.h.b16 %v1078
    %v1170 = vunpack.c.l.b16 %v1079
    %v1171 = vunpack.c.h.b16 %v1079
    %v1172 = vunpack.c.l.b16 %v1080
    %v1173 = vunpack.c.h.b16 %v1080
    %v1174 = vunpack.c.l.b16 %v1081
    %v1175 = vunpack.c.h.b16 %v1081
    %v1176 = vunpack.c.l.b16 %v1082
    %v1177 = vunpack.c.h.b16 %v1082
    %v1178 = vunpack.c.l.b16 %v1083
    %v1179 = vunpack.c.h.b16 %v1083
    %v1180 = vunpack.c.l.b16 %v1084
    %v1181 = vunpack.c.h.b16 %v1084
    %v1182 = vunpack.c.l.b16 %v1085
    %v1183 = vunpack.c.h.b16 %v1085
    %v1184 = vunpack.c.l.b16 %v1086
    %v1185 = vunpack.c.h.b16 %v1086
    %v1186 = vunpack.c.l.b16 %v1087
    %v1187 = vunpack.c.h.b16 %v1087
    %v1188 = vunpack.c.l.b16 %v1088
    %v1189 = vunpack.c.h.b16 %v1088
    %v1190 = vunpack.c.l.b16 %v1089
    %v1191 = vunpack.c.h.b16 %v1089
    %v1192 = vunpack.c.l.b16 %v1090
    %v1193 = vunpack.c.h.b16 %v1090
    %v1194 = vunpack.c.l.b16 %v1091
    %v1195 = vunpack.c.h.b16 %v1091
    %v1196 = vunpack.c.l.b16 %v1092
    %v1197 = vunpack.c.h.b16 %v1092
    %v1198 = vunpack.c.l.b16 %v1093
    %v1199 = vunpack.c.h.b16 %v1093
    %v1200 = vunpack.c.l.b16 %v1094
    %v1201 = vunpack.c.h.b16 %v1094
    %v1202 = vunpack.c.l.b16 %v1095
    %v1203 = vunpack.c.h.b16 %v1095
    %v1204 = vunpack.c.l.b16 %v1096
    %v1205 = vunpack.c.h.b16 %v1096
    %v1206 = vunpack.c.l.b16 %v1097
    %v1207 = vunpack.c.h.b16 %v1097
    %v1208 = vunpack.c.l.b16 %v1098
    %v1209 = vunpack.c.h.b16 %v1098
    %v1210 = vunpack.c.l.b16 %v1099
    %v1211 = vunpack.c.h.b16 %v1099
    %v1212 = vpack.c.b16 %v1150, %v1148
    %v1213 = vpack.c.b16 %v1151, %v1149
    %v1214 = vpack.c.b16 %v1154, %v1152
    %v1215 = vpack.c.b16 %v1155, %v1153
    %v1216 = vpack.c.b16 %v1158, %v1156
    %v1217 = vpack.c.b16 %v1159, %v1157
    %v1218 = vpack.c.b16 %v1162, %v1160
    %v1219 = vpack.c.b16 %v1163, %v1161
    %v1220 = vpack.c.b16 %v1166, %v1164
    %v1221 = vpack.c.b16 %v1167, %v1165
    %v1222 = vpack.c.b16 %v1170, %v1168
    %v1223 = vpack.c.b16 %v1171, %v1169
    %v1224 = vpack.c.b16 %v1174, %v1172
    %v1225 = vpack.c.b16 %v1175, %v1173
    %v1226 = vpack.c.b16 %v1178, %v1176
    %v1227 = vpack.c.b16 %v1179, %v1177
    %v1228 = vpack.c.b16 %v1182, %v1180
    %v1229 = vpack.c.b16 %v1183, %v1181
    %v1230 = vpack.c.b16 %v1186, %v1184
    %v1231 = vpack.c.b16 %v1187, %v1185
    %v1232 = vpack.c.b16 %v1190, %v1188
    %v1233 = vpack.c.b16 %v1191, %v1189
    %v1234 = vpack.c.b16 %v1194, %v1192
    %v1235 = vpack.c.b16 %v1195, %v1193
    %v1236 = vpack.c.b16 %v1198, %v1196
    %v1237 = vpack.c.b16 %v1199, %v1197
    %v1238 = vpack.c.b16 %v1202, %v1200
    %v1239 = vpack.c.b16 %v1203, %v1201
    %v1240 = vpack.c.b16 %v1206, %v1204
    %v1241 = vpack.c.b16 %v1207, %v1205
    %v1242 = vpack.c.b16 %v1210, %v1208
    %v1243 = vpack.c.b16 %v1211, %v1209
    %1276 = vmatprep.subr.bf16.mxu0 0
    %1277 = vmatpush1.bf16.msra.mxu0 %v1100
    %1278 = vmatprep.subr.bf16.mxu0 0
    %1279 = vmatpush1.bf16.msra.mxu0 %v1101
    %1280 = vmatprep.subr.bf16.mxu0 0
    %1281 = vmatpush1.bf16.msra.mxu0 %v1102
    %1282 = vmatprep.subr.bf16.mxu0 0
    %1283 = vmatpush1.bf16.msra.mxu0 %v1103
    %1284 = vmatprep.subr.bf16.mxu0 0
    %1285 = vmatpush1.bf16.msra.mxu0 %v1104
    %1286 = vmatprep.subr.bf16.mxu0 0
    %1287 = vmatpush1.bf16.msra.mxu0 %v1105
    %1288 = vmatprep.subr.bf16.mxu0 0
    %1289 = vmatpush1.bf16.msra.mxu0 %v1106
    %1290 = vmatprep.subr.bf16.mxu0 0
    %1291 = vmatpush1.bf16.msra.mxu0 %v1107
    %1292 = vmatprep.subr.bf16.mxu0 0
    %1293 = vmatpush1.bf16.msra.mxu0 %v1108
    %1294 = vmatprep.subr.bf16.mxu0 0
    %1295 = vmatpush1.bf16.msra.mxu0 %v1109
    %1296 = vmatprep.subr.bf16.mxu0 0
    %1297 = vmatpush1.bf16.msra.mxu0 %v1110
    %1298 = vmatprep.subr.bf16.mxu0 0
    %1299 = vmatpush1.bf16.msra.mxu0 %v1111
    %1300 = vmatprep.subr.bf16.mxu0 0
    %1301 = vmatpush1.bf16.msra.mxu0 %v1112
    %1302 = vmatprep.subr.bf16.mxu0 0
    %1303 = vmatpush1.bf16.msra.mxu0 %v1113
    %1304 = vmatprep.subr.bf16.mxu0 0
    %1305 = vmatpush1.bf16.msra.mxu0 %v1114
    %1306 = vmatprep.subr.bf16.mxu0 0
    %1307 = vmatpush1.bf16.msra.mxu0 %v1115
    %1308 = vmatprep.mubr.bf16.mxu0 %v1213
    %1309 = vmatmul.mubr.bf16.gmra.mrb[0].mxu0 %v1212
    %v1310 = vpop.f32.mrb[0].mxu0
    %v1311 = vadd.f32 %v910, %v1310
    %v1312 = vpop.f32.mrb[0].mxu0
    %v1313 = vpop.f32.mrb[0].mxu0
    %v1314 = vadd.f32 %v913, %v1313
    %v1315 = vpop.f32.mrb[0].mxu0
    %1316 = vmatprep.mubr.bf16.mxu0 %v1215
    %1317 = vmatmul.mubr.bf16.gmra.mrb[0].mxu0 %v1214
    %v1318 = vpop.f32.mrb[0].mxu0
    %v1319 = vadd.f32 %v918, %v1318
    %v1320 = vpop.f32.mrb[0].mxu0
    %v1321 = vpop.f32.mrb[0].mxu0
    %v1322 = vadd.f32 %v921, %v1321
    %v1323 = vpop.f32.mrb[0].mxu0
    %1324 = vmatprep.mubr.bf16.mxu0 %v1217
    %1325 = vmatmul.mubr.bf16.gmra.mrb[0].mxu0 %v1216
    %v1326 = vpop.f32.mrb[0].mxu0
    %v1327 = vadd.f32 %v926, %v1326
    %v1328 = vpop.f32.mrb[0].mxu0
    %v1329 = vpop.f32.mrb[0].mxu0
    %v1330 = vadd.f32 %v929, %v1329
    %v1331 = vpop.f32.mrb[0].mxu0
    %1332 = vmatprep.mubr.bf16.mxu0 %v1219
    %1333 = vmatmul.mubr.bf16.gmra.mrb[0].mxu0 %v1218
    %v1334 = vpop.f32.mrb[0].mxu0
    %v1335 = vadd.f32 %v934, %v1334
    %v1336 = vpop.f32.mrb[0].mxu0
    %v1337 = vpop.f32.mrb[0].mxu0
    %v1338 = vadd.f32 %v937, %v1337
    %v1339 = vpop.f32.mrb[0].mxu0
    %1340 = vmatprep.mubr.bf16.mxu0 %v1221
    %1341 = vmatmul.mubr.bf16.gmra.mrb[0].mxu0 %v1220
    %v1342 = vpop.f32.mrb[0].mxu0
    %v1343 = vadd.f32 %v942, %v1342
    %v1344 = vpop.f32.mrb[0].mxu0
    %v1345 = vpop.f32.mrb[0].mxu0
    %v1346 = vadd.f32 %v945, %v1345
    %v1347 = vpop.f32.mrb[0].mxu0
    %1348 = vmatprep.mubr.bf16.mxu0 %v1223
    %1349 = vmatmul.mubr.bf16.gmra.mrb[0].mxu0 %v1222
    %v1350 = vpop.f32.mrb[0].mxu0
    %v1351 = vadd.f32 %v950, %v1350
    %v1352 = vpop.f32.mrb[0].mxu0
    %v1353 = vpop.f32.mrb[0].mxu0
    %v1354 = vadd.f32 %v953, %v1353
    %v1355 = vpop.f32.mrb[0].mxu0
    %1356 = vmatprep.mubr.bf16.mxu0 %v1225
    %1357 = vmatmul.mubr.bf16.gmra.mrb[0].mxu0 %v1224
    %v1358 = vpop.f32.mrb[0].mxu0
    %v1359 = vadd.f32 %v958, %v1358
    %v1360 = vpop.f32.mrb[0].mxu0
    %v1361 = vpop.f32.mrb[0].mxu0
    %v1362 = vadd.f32 %v961, %v1361
    %v1363 = vpop.f32.mrb[0].mxu0
    %1364 = vmatprep.mubr.bf16.mxu0 %v1227
    %1365 = vmatmul.mubr.bf16.gmra.mrb[0].mxu0 %v1226
    %v1366 = vpop.f32.mrb[0].mxu0
    %v1367 = vadd.f32 %v966, %v1366
    %v1368 = vpop.f32.mrb[0].mxu0
    %v1369 = vpop.f32.mrb[0].mxu0
    %v1370 = vadd.f32 %v969, %v1369
    %v1371 = vpop.f32.mrb[0].mxu0
    %1372 = vmatprep.mubr.bf16.mxu0 %v1229
    %1373 = vmatmul.mubr.bf16.gmra.mrb[0].mxu0 %v1228
    %v1374 = vpop.f32.mrb[0].mxu0
    %v1375 = vadd.f32 %v974, %v1374
    %v1376 = vpop.f32.mrb[0].mxu0
    %v1377 = vpop.f32.mrb[0].mxu0
    %v1378 = vadd.f32 %v977, %v1377
    %v1379 = vpop.f32.mrb[0].mxu0
    %1380 = vmatprep.mubr.bf16.mxu0 %v1231
    %1381 = vmatmul.mubr.bf16.gmra.mrb[0].mxu0 %v1230
    %v1382 = vpop.f32.mrb[0].mxu0
    %v1383 = vadd.f32 %v982, %v1382
    %v1384 = vpop.f32.mrb[0].mxu0
    %v1385 = vpop.f32.mrb[0].mxu0
    %v1386 = vadd.f32 %v985, %v1385
    %v1387 = vpop.f32.mrb[0].mxu0
    %1388 = vmatprep.mubr.bf16.mxu0 %v1233
    %1389 = vmatmul.mubr.bf16.gmra.mrb[0].mxu0 %v1232
    %v1390 = vpop.f32.mrb[0].mxu0
    %v1391 = vadd.f32 %v990, %v1390
    %v1392 = vpop.f32.mrb[0].mxu0
    %v1393 = vpop.f32.mrb[0].mxu0
    %v1394 = vadd.f32 %v993, %v1393
    %v1395 = vpop.f32.mrb[0].mxu0
    %1396 = vmatprep.mubr.bf16.mxu0 %v1235
    %1397 = vmatmul.mubr.bf16.gmra.mrb[0].mxu0 %v1234
    %v1398 = vpop.f32.mrb[0].mxu0
    %v1399 = vadd.f32 %v998, %v1398
    %v1400 = vpop.f32.mrb[0].mxu0
    %v1401 = vpop.f32.mrb[0].mxu0
    %v1402 = vadd.f32 %v1001, %v1401
    %v1403 = vpop.f32.mrb[0].mxu0
    %1404 = vmatprep.mubr.bf16.mxu0 %v1237
    %1405 = vmatmul.mubr.bf16.gmra.mrb[0].mxu0 %v1236
    %v1406 = vpop.f32.mrb[0].mxu0
    %v1407 = vadd.f32 %v1006, %v1406
    %v1408 = vpop.f32.mrb[0].mxu0
    %v1409 = vpop.f32.mrb[0].mxu0
    %v1410 = vadd.f32 %v1009, %v1409
    %v1411 = vpop.f32.mrb[0].mxu0
    %1412 = vmatprep.mubr.bf16.mxu0 %v1239
    %1413 = vmatmul.mubr.bf16.gmra.mrb[0].mxu0 %v1238
    %v1414 = vpop.f32.mrb[0].mxu0
    %v1415 = vadd.f32 %v1014, %v1414
    %v1416 = vpop.f32.mrb[0].mxu0
    %v1417 = vpop.f32.mrb[0].mxu0
    %v1418 = vadd.f32 %v1017, %v1417
    %v1419 = vpop.f32.mrb[0].mxu0
    %1420 = vmatprep.mubr.bf16.mxu0 %v1241
    %1421 = vmatmul.mubr.bf16.gmra.mrb[0].mxu0 %v1240
    %v1422 = vpop.f32.mrb[0].mxu0
    %v1423 = vadd.f32 %v1022, %v1422
    %v1424 = vpop.f32.mrb[0].mxu0
    %v1425 = vpop.f32.mrb[0].mxu0
    %v1426 = vadd.f32 %v1025, %v1425
    %v1427 = vpop.f32.mrb[0].mxu0
    %1428 = vmatprep.mubr.bf16.mxu0 %v1243
    %1429 = vmatmul.mubr.bf16.gmra.mrb[0].mxu0 %v1242
    %v1430 = vpop.f32.mrb[0].mxu0
    %v1431 = vadd.f32 %v1030, %v1430
    %v1432 = vpop.f32.mrb[0].mxu0
    %v1433 = vpop.f32.mrb[0].mxu0
    %v1434 = vadd.f32 %v1033, %v1433
    %v1435 = vpop.f32.mrb[0].mxu0
    %1436 = vdwg.mxu0
    %v1437 = vmax.f32 %v1311, 0.0
    %v1438 = vmax.f32 %v1314, 0.0
    %v1439 = vmax.f32 %v1319, 0.0
    %v1440 = vmax.f32 %v1322, 0.0
    %v1441 = vmax.f32 %v1327, 0.0
    %v1442 = vmax.f32 %v1330, 0.0
    %v1443 = vmax.f32 %v1335, 0.0
    %v1444 = vmax.f32 %v1338, 0.0
    %v1445 = vmax.f32 %v1343, 0.0
    %v1446 = vmax.f32 %v1346, 0.0
    %v1447 = vmax.f32 %v1351, 0.0
    %v1448 = vmax.f32 %v1354, 0.0
    %v1449 = vmax.f32 %v1359, 0.0
    %v1450 = vmax.f32 %v1362, 0.0
    %v1451 = vmax.f32 %v1367, 0.0
    %v1452 = vmax.f32 %v1370, 0.0
    %v1453 = vmax.f32 %v1375, 0.0
    %v1454 = vmax.f32 %v1378, 0.0
    %v1455 = vmax.f32 %v1383, 0.0
    %v1456 = vmax.f32 %v1386, 0.0
    %v1457 = vmax.f32 %v1391, 0.0
    %v1458 = vmax.f32 %v1394, 0.0
    %v1459 = vmax.f32 %v1399, 0.0
    %v1460 = vmax.f32 %v1402, 0.0
    %v1461 = vmax.f32 %v1407, 0.0
    %v1462 = vmax.f32 %v1410, 0.0
    %v1463 = vmax.f32 %v1415, 0.0
    %v1464 = vmax.f32 %v1418, 0.0
    %v1465 = vmax.f32 %v1423, 0.0
    %v1466 = vmax.f32 %v1426, 0.0
    %v1467 = vmax.f32 %v1431, 0.0
    %v1468 = vmax.f32 %v1434, 0.0
    %v1469 = vld [vmem:[%s4] sm:$0x3]
    %v1470 = vpack.c.bf16 %v1438, %v1437
    %v1471 = vpack.c.bf16 %v1440, %v1439
    %v1472 = vpack.c.bf16 %v1442, %v1441
    %v1473 = vpack.c.bf16 %v1444, %v1443
    %v1474 = vpack.c.bf16 %v1446, %v1445
    %v1475 = vpack.c.bf16 %v1448, %v1447
    %v1476 = vpack.c.bf16 %v1450, %v1449
    %v1477 = vpack.c.bf16 %v1452, %v1451
    %v1478 = vpack.c.bf16 %v1454, %v1453
    %v1479 = vpack.c.bf16 %v1456, %v1455
    %v1480 = vpack.c.bf16 %v1458, %v1457
    %v1481 = vpack.c.bf16 %v1460, %v1459
    %v1482 = vpack.c.bf16 %v1462, %v1461
    %v1483 = vpack.c.bf16 %v1464, %v1463
    %v1484 = vpack.c.bf16 %v1466, %v1465
    %v1485 = vpack.c.bf16 %v1468, %v1467
    %s1486 = sld [smem:[#allocation2]]
    %v1487 = vstv %s1486
    %v1490 = vunpack.c.l.s4 1966171168
    %v1491 = vunpack.c.0.s8 %v1490
    %v1492 = vlaneseq
    %v1493 = vshrl.u32 %v1492, 7
    %v1494 = vsub.s32 %v1491, %v1493
    %v1495 = vrot.slane %v1469, %v1494
    %v1496 = vcombine.high %v1495, %v1495
    %v1498 = vunpack.c.l.s4 1966171168
    %v1499 = vunpack.c.0.s8 %v1498
    %v1500 = vlaneseq
    %v1501 = vshrl.u32 %v1500, 7
    %v1502 = vsub.s32 %v1499, %v1501
    %v1503 = vrot.slane %v1495, %v1502
    %v1505 = vunpack.c.l.s4 1966171168
    %v1506 = vunpack.c.0.s8 %v1505
    %v1507 = vlaneseq
    %v1508 = vshrl.u32 %v1507, 7
    %v1509 = vsub.s32 %v1506, %v1508
    %v1510 = vrot.slane %v1496, %v1509
    %1513 = vmatprep.subr.bf16.mxu0 0
    %1514 = vmatpush1.bf16.msra.mxu0 %v1470
    %1515 = vmatprep.subr.bf16.mxu0 0
    %1516 = vmatpush1.bf16.msra.mxu0 %v1471
    %1517 = vmatprep.subr.bf16.mxu0 0
    %1518 = vmatpush1.bf16.msra.mxu0 %v1472
    %1519 = vmatprep.subr.bf16.mxu0 0
    %1520 = vmatpush1.bf16.msra.mxu0 %v1473
    %1521 = vmatprep.subr.bf16.mxu0 0
    %1522 = vmatpush1.bf16.msra.mxu0 %v1474
    %1523 = vmatprep.subr.bf16.mxu0 0
    %1524 = vmatpush1.bf16.msra.mxu0 %v1475
    %1525 = vmatprep.subr.bf16.mxu0 0
    %1526 = vmatpush1.bf16.msra.mxu0 %v1476
    %1527 = vmatprep.subr.bf16.mxu0 0
    %1528 = vmatpush1.bf16.msra.mxu0 %v1477
    %1529 = vmatprep.subr.bf16.mxu0 0
    %1530 = vmatpush1.bf16.msra.mxu0 %v1478
    %1531 = vmatprep.subr.bf16.mxu0 0
    %1532 = vmatpush1.bf16.msra.mxu0 %v1479
    %1533 = vmatprep.subr.bf16.mxu0 0
    %1534 = vmatpush1.bf16.msra.mxu0 %v1480
    %1535 = vmatprep.subr.bf16.mxu0 0
    %1536 = vmatpush1.bf16.msra.mxu0 %v1481
    %1537 = vmatprep.subr.bf16.mxu0 0
    %1538 = vmatpush1.bf16.msra.mxu0 %v1482
    %1539 = vmatprep.subr.bf16.mxu0 0
    %1540 = vmatpush1.bf16.msra.mxu0 %v1483
    %1541 = vmatprep.subr.bf16.mxu0 0
    %1542 = vmatpush1.bf16.msra.mxu0 %v1484
    %1543 = vmatprep.subr.bf16.mxu0 0
    %1544 = vmatpush1.bf16.msra.mxu0 %v1485
    %1545 = vmatprep.mubr.bf16.mxu0 %v1510
    %1546 = vmatmul.mubr.bf16.gmra.mrb[0].mxu0 %v1503
    %v1547 = vpop.f32.mrb[0].mxu0
    %v1548 = vadd.f32 %v1487, %v1547
    %v1549 = vpop.f32.mrb[0].mxu0
    %v1550 = vpop.f32.mrb[0].mxu0
    %v1551 = vpop.f32.mrb[0].mxu0
    %1552 = vdwg.mxu0
    %1553 = vst [vmem:[#allocation3] sm:$0x1] %v1548
    // Predicated region
    $region26: #{tpu_custom_call.1} parent=1 // pred_check
      _
    $region27: #{tpu_custom_call.1} parent=1 // pred_check_branch
      %1555 = sbr.rel (0) target = $region29
    $region28: #{tpu_custom_call.1} parent=1 // pred_region
      %s1557 = ssub.s32 16, 16
      %1558 = vsyncadd [#allocation4], %s1557
      %s1560 = sshll.u32 [#allocation3], 4
      %s1561 = int_to_ptr.vmem [resolvable:$true] %s1560
      %1563 = dma.vmem_to_hbm [thread:$0]  %s1561, 16, %s6, [#allocation4]
    $region29: #{tpu_custom_call.1} parent=1 // pred_fallthru
      _
    // Predicated region
    $region30: #{tpu_custom_call.1} parent=1 // pred_check
      _
    $region31: #{tpu_custom_call.1} parent=1 // pred_check_branch
      %1565 = sbr.rel (0) target = $region33
    $region32: #{tpu_custom_call.1} parent=1 // pred_region
      %1566 = dma.done [#allocation4], 16
    $region33: #{tpu_custom_call.1} parent=1 // pred_fallthru
      _
    %1567 = vsyncpa [#allocation4], 1

</llo_original>
